<compile_context>
chip_gen: v6e
topology: v6e:2x2x1
jax: 0.10.0
libtpu: 0.0.40
codegen_flags: <defaults>
</compile_context>

<pallas_src>
import functools

import jax
import jax.numpy as jnp
from jax.experimental import pallas as pl
from jax.experimental.pallas import tpu as pltpu

EPS = 1e-5


def _basic_block_kernel(x_ref, w_ref, mtop_ref, mbot_ref,
                        g1_ref, b1_ref, g2_ref, b2_ref, o_ref,
                        *, N, H, W, C):
    """All activation tensors are (N*H, W*C) f32 slabs (lane-dense, WC=128)."""
    NH, WC = N * H, W * C
    inv_count = 1.0 / float(N * H * W)

    # (NH, 1) 0/1 edge masks precomputed in the wrapper ("same" padding in H).
    mtop = mtop_ref[...]   # 1.0 where h > 0      (row h-1 exists within image)
    mbot = mbot_ref[...]   # 1.0 where h < H - 1  (row h+1 exists within image)

    def conv3x3(x2d):
        # Vertical taps: sublane rotations (XLU) + boundary mask (VPU), no MXU.
        up = pltpu.roll(x2d, shift=1, axis=0) * mtop          # row h-1
        dn = pltpu.roll(x2d, shift=NH - 1, axis=0) * mbot     # row h+1
        # Horizontal taps + channel contraction for all three kernel rows fused
        # into a single K=3*WC MXU matmul ("same" W-padding is baked into the
        # band structure of the stacked weight).
        x3 = jnp.concatenate([up, x2d, dn], axis=1)           # (NH, 3*WC)
        # Conv bias intentionally dropped: a per-channel constant is cancelled
        # exactly by the training-mode BN batch-mean subtraction that follows.
        return jnp.dot(x3, w_ref[...], preferred_element_type=jnp.float32)

    def chan_allreduce(v):
        # Reduce + broadcast across the W lane blocks (channel stride C) with a
        # log2(W)-step lane-roll butterfly (XLU slot) on a single (1, WC) row.
        step = WC // 2
        while step >= C:                     # static Python loop, unrolled
            v = v + pltpu.roll(v, shift=step, axis=1)
            step //= 2
        return v                             # per-channel sum, broadcast over W

    def batchnorm(y, g, b):
        # Training-mode BatchNorm2d.  Sublane-reduce first (M: NH -> 1), then
        # the cheap cross-W channel reduce on the tiny row vectors.
        s = chan_allreduce(jnp.sum(y, axis=0, keepdims=True))        # (1, WC)
        sq = chan_allreduce(jnp.sum(y * y, axis=0, keepdims=True))   # (1, WC)
        mean = s * inv_count
        var = sq * inv_count - mean * mean           # biased variance
        scale = jax.lax.rsqrt(var + EPS) * g
        shift = b - mean * scale
        return y * scale + shift                     # folded epilogue (one FMA pass)

    h1 = jnp.maximum(batchnorm(conv3x3(x_ref[...]), g1_ref[...], b1_ref[...]),
                     0.0)                                  # relu(BN1(conv(x)))
    z = batchnorm(conv3x3(h1), g2_ref[...], b2_ref[...])   # BN2(conv(h1))
    # Residual re-read from the VMEM-resident input ref (not kept live).
    o_ref[...] = jnp.maximum(z + x_ref[...], 0.0)


@jax.jit
def basic_block_forward(x_nchw, w_hwio, b, g1, be1, g2, be2):
    """x_nchw: (N, C, H, W). w_hwio: (3, 3, C, C) [kh, kw, cin, cout].

    The conv bias `b` is accepted for interface parity but is mathematically
    cancelled by the training-mode BN that follows each conv, so it is not
    forwarded to the kernel.
    """
    N, C, H, W = x_nchw.shape
    NH, WC = N * H, W * C
    assert W & (W - 1) == 0, "butterfly channel reduce assumes W is a power of 2"
    f32 = jnp.float32

    # ---- layout plumbing (wrapper side) -------------------------------------
    # NCHW -> lane-dense slab (N*H, W*C): slab[n*H+h, w*C+c] = x[n, c, h, w]
    x_slab = jnp.transpose(x_nchw, (0, 2, 3, 1)).reshape(NH, WC)

    # Stacked banded conv weight: rows [dy=0 | dy=1 | dy=2]; each (WC, WC) block
    # applies the three horizontal taps + input-channel contraction for that
    # kernel row, with the "same" W-padding baked into the band structure.
    w_stk = jnp.concatenate([
        sum(jnp.kron(jnp.eye(W, k=1 - dx, dtype=f32), w_hwio[dy, dx].astype(f32))
            for dx in range(3))
        for dy in range(3)
    ], axis=0)                                                # (3*WC, WC)

    # (NH, 1) boundary masks for the vertical taps ("same" padding in H).
    h_idx = jnp.arange(NH, dtype=jnp.int32) % H
    mtop = (h_idx != 0).astype(f32).reshape(NH, 1)
    mbot = (h_idx != H - 1).astype(f32).reshape(NH, 1)

    tile_c = lambda v: jnp.tile(v.reshape(1, C).astype(f32), (1, W))   # (1, WC)

    kernel = functools.partial(_basic_block_kernel, N=N, H=H, W=W, C=C)
    vmem_spec = pl.BlockSpec(memory_space=pltpu.MemorySpace.VMEM)
    out_slab = pl.pallas_call(
        kernel,
        out_shape=jax.ShapeDtypeStruct((NH, WC), f32),
        in_specs=[vmem_spec] * 8,
        out_specs=vmem_spec,
    )(x_slab, w_stk, mtop, mbot,
      tile_c(g1), tile_c(be1), tile_c(g2), tile_c(be2))

    # slab -> NCHW
    return jnp.transpose(out_slab.reshape(N, H, W, C), (0, 3, 1, 2))


def _reference(x_nchw, w_hwio, b, g1, be1, g2, be2):
    """Pure-JAX reference mirroring the PyTorch forward (training-mode BN)."""
    def conv(x):
        y = jax.lax.conv_general_dilated(
            x, w_hwio, window_strides=(1, 1), padding="SAME",
            dimension_numbers=("NCHW", "HWIO", "NCHW"))
        return y + b[None, :, None, None]

    def bn(x, g, be):
        mean = jnp.mean(x, axis=(0, 2, 3), keepdims=True)
        var = jnp.mean((x - mean) ** 2, axis=(0, 2, 3), keepdims=True)
        return ((x - mean) * jax.lax.rsqrt(var + EPS)
                * g[None, :, None, None] + be[None, :, None, None])

    residual = x_nchw
    y = jnp.maximum(bn(conv(x_nchw), g1, be1), 0.0)
    z = bn(conv(y), g2, be2)
    return jnp.maximum(z + residual, 0.0)


if __name__ == "__main__":
    N, C, H, W = 2, 8, 16, 16   # dim = 8 -> W*C = 128 lanes (lane-dense slab)
    key = jax.random.PRNGKey(0)
    kx, kw, kb, kg1, kb1, kg2, kb2 = jax.random.split(key, 7)

    x = jax.random.normal(kx, (N, C, H, W), dtype=jnp.float32)
    w = jax.random.normal(kw, (3, 3, C, C), dtype=jnp.float32) * 0.1  # HWIO
    b = jax.random.normal(kb, (C,), dtype=jnp.float32) * 0.1
    g1 = 1.0 + 0.1 * jax.random.normal(kg1, (C,), dtype=jnp.float32)
    be1 = 0.1 * jax.random.normal(kb1, (C,), dtype=jnp.float32)
    g2 = 1.0 + 0.1 * jax.random.normal(kg2, (C,), dtype=jnp.float32)
    be2 = 0.1 * jax.random.normal(kb2, (C,), dtype=jnp.float32)

    out = basic_block_forward(x, w, b, g1, be1, g2, be2)
    out = jax.block_until_ready(out)

    ref = _reference(x, w, b, g1, be1, g2, be2)
    assert out.shape == (N, C, H, W)
    err = jnp.max(jnp.abs(out - ref))
    assert jnp.allclose(out, ref, atol=1e-3, rtol=1e-3), f"max err {err}"

    print("KERNEL_OK")
</pallas_src>

<mosaic_0001>
module attributes {stable_mosaic.version = 11 : i64} {
  func.func @_basic_block_kernel(%arg0: memref<32x128xf32, #tpu.memory_space<vmem>>, %arg1: memref<384x128xf32, #tpu.memory_space<vmem>>, %arg2: memref<32x1xf32, #tpu.memory_space<vmem>>, %arg3: memref<32x1xf32, #tpu.memory_space<vmem>>, %arg4: memref<1x128xf32, #tpu.memory_space<vmem>>, %arg5: memref<1x128xf32, #tpu.memory_space<vmem>>, %arg6: memref<1x128xf32, #tpu.memory_space<vmem>>, %arg7: memref<1x128xf32, #tpu.memory_space<vmem>>, %arg8: memref<32x128xf32, #tpu.memory_space<vmem>>) attributes {dimension_semantics = [], scalar_prefetch = 0 : i64, scratch_operands = 0 : i64, tpu.core_type = #tpu.core_type<tc>} {
    %c0 = arith.constant 0 : index
    %c0_0 = arith.constant 0 : index
    %0 = vector.load %arg2[%c0, %c0_0] : memref<32x1xf32, #tpu.memory_space<vmem>>, vector<32x1xf32>
    %c0_1 = arith.constant 0 : index
    %c0_2 = arith.constant 0 : index
    %1 = vector.load %arg3[%c0_1, %c0_2] : memref<32x1xf32, #tpu.memory_space<vmem>>, vector<32x1xf32>
    %c0_3 = arith.constant 0 : index
    %c0_4 = arith.constant 0 : index
    %2 = vector.load %arg0[%c0_3, %c0_4] : memref<32x128xf32, #tpu.memory_space<vmem>>, vector<32x128xf32>
    %c1_i32 = arith.constant 1 : i32
    %3 = tpu.dynamic_rotate %2 by %c1_i32 dim 0 : vector<32x128xf32>, i32 -> vector<32x128xf32>
    %4 = vector.broadcast %0 : vector<32x1xf32> to vector<32x128xf32>
    %5 = arith.mulf %3, %4 : vector<32x128xf32>
    %c31_i32 = arith.constant 31 : i32
    %6 = tpu.dynamic_rotate %2 by %c31_i32 dim 0 : vector<32x128xf32>, i32 -> vector<32x128xf32>
    %7 = vector.broadcast %1 : vector<32x1xf32> to vector<32x128xf32>
    %8 = arith.mulf %6, %7 : vector<32x128xf32>
    %9 = tpu.concatenate %5, %2, %8 in 1 : vector<32x128xf32>, vector<32x128xf32>, vector<32x128xf32> -> vector<32x384xf32>
    %c0_5 = arith.constant 0 : index
    %c0_6 = arith.constant 0 : index
    %10 = vector.load %arg1[%c0_5, %c0_6] : memref<384x128xf32, #tpu.memory_space<vmem>>, vector<384x128xf32>
    %cst = arith.constant dense<0.000000e+00> : vector<32x128xf32>
    %11 = tpu.matmul %9, %10, %cst {dimension_numbers = #tpu.dot_dimension_numbers<[1], [0], [0], [1], [0, 0, 1, 1], [], []>} : vector<32x384xf32>, vector<384x128xf32>, vector<32x128xf32> -> vector<32x128xf32>
    %c0_7 = arith.constant 0 : index
    %c0_8 = arith.constant 0 : index
    %12 = vector.load %arg4[%c0_7, %c0_8] : memref<1x128xf32, #tpu.memory_space<vmem>>, vector<1x128xf32>
    %c0_9 = arith.constant 0 : index
    %c0_10 = arith.constant 0 : index
    %13 = vector.load %arg5[%c0_9, %c0_10] : memref<1x128xf32, #tpu.memory_space<vmem>>, vector<1x128xf32>
    %cst_11 = arith.constant dense<0.000000e+00> : vector<128xf32>
    %14 = vector.multi_reduction <add>, %11, %cst_11 [0] : vector<32x128xf32> to vector<128xf32>
    %15 = vector.shape_cast %14 : vector<128xf32> to vector<1x128xf32>
    %c64_i32 = arith.constant 64 : i32
    %16 = tpu.dynamic_rotate %15 by %c64_i32 dim 1 : vector<1x128xf32>, i32 -> vector<1x128xf32>
    %17 = arith.addf %15, %16 : vector<1x128xf32>
    %c32_i32 = arith.constant 32 : i32
    %18 = tpu.dynamic_rotate %17 by %c32_i32 dim 1 : vector<1x128xf32>, i32 -> vector<1x128xf32>
    %19 = arith.addf %17, %18 : vector<1x128xf32>
    %c16_i32 = arith.constant 16 : i32
    %20 = tpu.dynamic_rotate %19 by %c16_i32 dim 1 : vector<1x128xf32>, i32 -> vector<1x128xf32>
    %21 = arith.addf %19, %20 : vector<1x128xf32>
    %c8_i32 = arith.constant 8 : i32
    %22 = tpu.dynamic_rotate %21 by %c8_i32 dim 1 : vector<1x128xf32>, i32 -> vector<1x128xf32>
    %23 = arith.addf %21, %22 : vector<1x128xf32>
    %24 = arith.mulf %11, %11 : vector<32x128xf32>
    %cst_12 = arith.constant dense<0.000000e+00> : vector<128xf32>
    %25 = vector.multi_reduction <add>, %24, %cst_12 [0] : vector<32x128xf32> to vector<128xf32>
    %26 = vector.shape_cast %25 : vector<128xf32> to vector<1x128xf32>
    %c64_i32_13 = arith.constant 64 : i32
    %27 = tpu.dynamic_rotate %26 by %c64_i32_13 dim 1 : vector<1x128xf32>, i32 -> vector<1x128xf32>
    %28 = arith.addf %26, %27 : vector<1x128xf32>
    %c32_i32_14 = arith.constant 32 : i32
    %29 = tpu.dynamic_rotate %28 by %c32_i32_14 dim 1 : vector<1x128xf32>, i32 -> vector<1x128xf32>
    %30 = arith.addf %28, %29 : vector<1x128xf32>
    %c16_i32_15 = arith.constant 16 : i32
    %31 = tpu.dynamic_rotate %30 by %c16_i32_15 dim 1 : vector<1x128xf32>, i32 -> vector<1x128xf32>
    %32 = arith.addf %30, %31 : vector<1x128xf32>
    %c8_i32_16 = arith.constant 8 : i32
    %33 = tpu.dynamic_rotate %32 by %c8_i32_16 dim 1 : vector<1x128xf32>, i32 -> vector<1x128xf32>
    %34 = arith.addf %32, %33 : vector<1x128xf32>
    %cst_17 = arith.constant 0.001953125 : f32
    %35 = vector.broadcast %cst_17 : f32 to vector<1x128xf32>
    %36 = arith.mulf %23, %35 : vector<1x128xf32>
    %cst_18 = arith.constant 0.001953125 : f32
    %37 = vector.broadcast %cst_18 : f32 to vector<1x128xf32>
    %38 = arith.mulf %34, %37 : vector<1x128xf32>
    %39 = arith.mulf %36, %36 : vector<1x128xf32>
    %40 = arith.subf %38, %39 : vector<1x128xf32>
    %cst_19 = arith.constant 9.99999974E-6 : f32
    %41 = vector.broadcast %cst_19 : f32 to vector<1x128xf32>
    %42 = arith.addf %40, %41 : vector<1x128xf32>
    %43 = math.rsqrt %42 : vector<1x128xf32>
    %44 = arith.mulf %43, %12 : vector<1x128xf32>
    %45 = arith.mulf %36, %44 : vector<1x128xf32>
    %46 = arith.subf %13, %45 : vector<1x128xf32>
    %47 = vector.broadcast %44 : vector<1x128xf32> to vector<32x128xf32>
    %48 = arith.mulf %11, %47 : vector<32x128xf32>
    %49 = vector.broadcast %46 : vector<1x128xf32> to vector<32x128xf32>
    %50 = arith.addf %48, %49 : vector<32x128xf32>
    %cst_20 = arith.constant 0.000000e+00 : f32
    %51 = vector.broadcast %cst_20 : f32 to vector<32x128xf32>
    %52 = arith.maximumf %50, %51 : vector<32x128xf32>
    %c1_i32_21 = arith.constant 1 : i32
    %53 = tpu.dynamic_rotate %52 by %c1_i32_21 dim 0 : vector<32x128xf32>, i32 -> vector<32x128xf32>
    %54 = vector.broadcast %0 : vector<32x1xf32> to vector<32x128xf32>
    %55 = arith.mulf %53, %54 : vector<32x128xf32>
    %c31_i32_22 = arith.constant 31 : i32
    %56 = tpu.dynamic_rotate %52 by %c31_i32_22 dim 0 : vector<32x128xf32>, i32 -> vector<32x128xf32>
    %57 = vector.broadcast %1 : vector<32x1xf32> to vector<32x128xf32>
    %58 = arith.mulf %56, %57 : vector<32x128xf32>
    %59 = tpu.concatenate %55, %52, %58 in 1 : vector<32x128xf32>, vector<32x128xf32>, vector<32x128xf32> -> vector<32x384xf32>
    %c0_23 = arith.constant 0 : index
    %c0_24 = arith.constant 0 : index
    %60 = vector.load %arg1[%c0_23, %c0_24] : memref<384x128xf32, #tpu.memory_space<vmem>>, vector<384x128xf32>
    %cst_25 = arith.constant dense<0.000000e+00> : vector<32x128xf32>
    %61 = tpu.matmul %59, %60, %cst_25 {dimension_numbers = #tpu.dot_dimension_numbers<[1], [0], [0], [1], [0, 0, 1, 1], [], []>} : vector<32x384xf32>, vector<384x128xf32>, vector<32x128xf32> -> vector<32x128xf32>
    %c0_26 = arith.constant 0 : index
    %c0_27 = arith.constant 0 : index
    %62 = vector.load %arg6[%c0_26, %c0_27] : memref<1x128xf32, #tpu.memory_space<vmem>>, vector<1x128xf32>
    %c0_28 = arith.constant 0 : index
    %c0_29 = arith.constant 0 : index
    %63 = vector.load %arg7[%c0_28, %c0_29] : memref<1x128xf32, #tpu.memory_space<vmem>>, vector<1x128xf32>
    %cst_30 = arith.constant dense<0.000000e+00> : vector<128xf32>
    %64 = vector.multi_reduction <add>, %61, %cst_30 [0] : vector<32x128xf32> to vector<128xf32>
    %65 = vector.shape_cast %64 : vector<128xf32> to vector<1x128xf32>
    %c64_i32_31 = arith.constant 64 : i32
    %66 = tpu.dynamic_rotate %65 by %c64_i32_31 dim 1 : vector<1x128xf32>, i32 -> vector<1x128xf32>
    %67 = arith.addf %65, %66 : vector<1x128xf32>
    %c32_i32_32 = arith.constant 32 : i32
    %68 = tpu.dynamic_rotate %67 by %c32_i32_32 dim 1 : vector<1x128xf32>, i32 -> vector<1x128xf32>
    %69 = arith.addf %67, %68 : vector<1x128xf32>
    %c16_i32_33 = arith.constant 16 : i32
    %70 = tpu.dynamic_rotate %69 by %c16_i32_33 dim 1 : vector<1x128xf32>, i32 -> vector<1x128xf32>
    %71 = arith.addf %69, %70 : vector<1x128xf32>
    %c8_i32_34 = arith.constant 8 : i32
    %72 = tpu.dynamic_rotate %71 by %c8_i32_34 dim 1 : vector<1x128xf32>, i32 -> vector<1x128xf32>
    %73 = arith.addf %71, %72 : vector<1x128xf32>
    %74 = arith.mulf %61, %61 : vector<32x128xf32>
    %cst_35 = arith.constant dense<0.000000e+00> : vector<128xf32>
    %75 = vector.multi_reduction <add>, %74, %cst_35 [0] : vector<32x128xf32> to vector<128xf32>
    %76 = vector.shape_cast %75 : vector<128xf32> to vector<1x128xf32>
    %c64_i32_36 = arith.constant 64 : i32
    %77 = tpu.dynamic_rotate %76 by %c64_i32_36 dim 1 : vector<1x128xf32>, i32 -> vector<1x128xf32>
    %78 = arith.addf %76, %77 : vector<1x128xf32>
    %c32_i32_37 = arith.constant 32 : i32
    %79 = tpu.dynamic_rotate %78 by %c32_i32_37 dim 1 : vector<1x128xf32>, i32 -> vector<1x128xf32>
    %80 = arith.addf %78, %79 : vector<1x128xf32>
    %c16_i32_38 = arith.constant 16 : i32
    %81 = tpu.dynamic_rotate %80 by %c16_i32_38 dim 1 : vector<1x128xf32>, i32 -> vector<1x128xf32>
    %82 = arith.addf %80, %81 : vector<1x128xf32>
    %c8_i32_39 = arith.constant 8 : i32
    %83 = tpu.dynamic_rotate %82 by %c8_i32_39 dim 1 : vector<1x128xf32>, i32 -> vector<1x128xf32>
    %84 = arith.addf %82, %83 : vector<1x128xf32>
    %cst_40 = arith.constant 0.001953125 : f32
    %85 = vector.broadcast %cst_40 : f32 to vector<1x128xf32>
    %86 = arith.mulf %73, %85 : vector<1x128xf32>
    %cst_41 = arith.constant 0.001953125 : f32
    %87 = vector.broadcast %cst_41 : f32 to vector<1x128xf32>
    %88 = arith.mulf %84, %87 : vector<1x128xf32>
    %89 = arith.mulf %86, %86 : vector<1x128xf32>
    %90 = arith.subf %88, %89 : vector<1x128xf32>
    %cst_42 = arith.constant 9.99999974E-6 : f32
    %91 = vector.broadcast %cst_42 : f32 to vector<1x128xf32>
    %92 = arith.addf %90, %91 : vector<1x128xf32>
    %93 = math.rsqrt %92 : vector<1x128xf32>
    %94 = arith.mulf %93, %62 : vector<1x128xf32>
    %95 = arith.mulf %86, %94 : vector<1x128xf32>
    %96 = arith.subf %63, %95 : vector<1x128xf32>
    %97 = vector.broadcast %94 : vector<1x128xf32> to vector<32x128xf32>
    %98 = arith.mulf %61, %97 : vector<32x128xf32>
    %99 = vector.broadcast %96 : vector<1x128xf32> to vector<32x128xf32>
    %100 = arith.addf %98, %99 : vector<32x128xf32>
    %c0_43 = arith.constant 0 : index
    %c0_44 = arith.constant 0 : index
    %101 = vector.load %arg0[%c0_43, %c0_44] : memref<32x128xf32, #tpu.memory_space<vmem>>, vector<32x128xf32>
    %102 = arith.addf %100, %101 : vector<32x128xf32>
    %cst_45 = arith.constant 0.000000e+00 : f32
    %103 = vector.broadcast %cst_45 : f32 to vector<32x128xf32>
    %104 = arith.maximumf %102, %103 : vector<32x128xf32>
    %c0_46 = arith.constant 0 : index
    %c0_47 = arith.constant 0 : index
    %105 = vector.load %arg8[%c0_46, %c0_47] : memref<32x128xf32, #tpu.memory_space<vmem>>, vector<32x128xf32>
    tpu.vector_store %arg8[%c0_46, %c0_47], %104 {strides = array<i32>} : memref<32x128xf32, #tpu.memory_space<vmem>>, vector<32x128xf32>,
    return
  }
}

</mosaic_0001>

<llo_original>
// kernel: basic_block_forward.1
$region0: #{basic_block_forward.1}
  #allocation0 [shape = 'u32[]', space=smem, size = 0x4, offset = 0x4, fixed_abs, tag = 'smem constant byte address 0x4 - core index']
  #allocation1 [shape = 'u32[144,128]{1,0:T(1,128)}', space=vmem, size = 0x12000, scoped, tag = 'internal scratch']
  %s0 = inlined_call_operand.vmem [shape: f32[32,128], index: 0, kind: input, shape index: {}]
  %s1 = inlined_call_operand.vmem [shape: f32[384,128], index: 1, kind: input, shape index: {}]
  %s2 = inlined_call_operand.vmem [shape: f32[32,1], index: 2, kind: input, shape index: {}]
  %s3 = inlined_call_operand.vmem [shape: f32[32,1], index: 3, kind: input, shape index: {}]
  %s4 = inlined_call_operand.vmem [shape: f32[1,128], index: 4, kind: input, shape index: {}]
  %s5 = inlined_call_operand.vmem [shape: f32[1,128], index: 5, kind: input, shape index: {}]
  %s6 = inlined_call_operand.vmem [shape: f32[1,128], index: 6, kind: input, shape index: {}]
  %s7 = inlined_call_operand.vmem [shape: f32[1,128], index: 7, kind: input, shape index: {}]
  %s8 = inlined_call_operand.vmem [shape: f32[32,128], index: 8, kind: output, shape index: {}]
  %s9 = sld [smem:[#allocation0]]
  $region42: #{basic_block_forward.1} parent=0
    _
  %s11 = ssub.s32 1, %s9
  %s12 = scalar_select 0, %s11, %s9
  // Predicated region
  $region2: #{basic_block_forward.1} parent=0 // pred_check
    _
  $region3: #{basic_block_forward.1} parent=0 // pred_check_branch
    %14 = sbr.rel (0) target = $region5
  $region4: #{basic_block_forward.1} parent=0 // pred_region
    _
  $region5: #{basic_block_forward.1} parent=0 // pred_fallthru
    _
  // Predicated region
  $region6: #{basic_block_forward.1} parent=0 // pred_check
    _
  $region7: #{basic_block_forward.1} parent=0 // pred_check_branch
    %16 = sbr.rel (0) target = $region9
  $region8: #{basic_block_forward.1} parent=0 // pred_region
    _
  $region9: #{basic_block_forward.1} parent=0 // pred_fallthru
    _
  // Predicated region
  $region10: #{basic_block_forward.1} parent=0 // pred_check
    _
  $region11: #{basic_block_forward.1} parent=0 // pred_check_branch
    %18 = sbr.rel (0) target = $region13
  $region12: #{basic_block_forward.1} parent=0 // pred_region
    _
  $region13: #{basic_block_forward.1} parent=0 // pred_fallthru
    _
  // Predicated region
  $region14: #{basic_block_forward.1} parent=0 // pred_check
    _
  $region15: #{basic_block_forward.1} parent=0 // pred_check_branch
    %20 = sbr.rel (0) target = $region17
  $region16: #{basic_block_forward.1} parent=0 // pred_region
    _
  $region17: #{basic_block_forward.1} parent=0 // pred_fallthru
    _
  // Predicated region
  $region18: #{basic_block_forward.1} parent=0 // pred_check
    _
  $region19: #{basic_block_forward.1} parent=0 // pred_check_branch
    %22 = sbr.rel (0) target = $region21
  $region20: #{basic_block_forward.1} parent=0 // pred_region
    _
  $region21: #{basic_block_forward.1} parent=0 // pred_fallthru
    _
  // Predicated region
  $region22: #{basic_block_forward.1} parent=0 // pred_check
    _
  $region23: #{basic_block_forward.1} parent=0 // pred_check_branch
    %24 = sbr.rel (0) target = $region25
  $region24: #{basic_block_forward.1} parent=0 // pred_region
    _
  $region25: #{basic_block_forward.1} parent=0 // pred_fallthru
    _
  // Predicated region
  $region26: #{basic_block_forward.1} parent=0 // pred_check
    _
  $region27: #{basic_block_forward.1} parent=0 // pred_check_branch
    %26 = sbr.rel (0) target = $region29
  $region28: #{basic_block_forward.1} parent=0 // pred_region
    _
  $region29: #{basic_block_forward.1} parent=0 // pred_fallthru
    _
  // Predicated region
  $region30: #{basic_block_forward.1} parent=0 // pred_check
    _
  $region31: #{basic_block_forward.1} parent=0 // pred_check_branch
    %28 = sbr.rel (0) target = $region33
  $region32: #{basic_block_forward.1} parent=0 // pred_region
    _
  $region33: #{basic_block_forward.1} parent=0 // pred_fallthru
    _
  %v29 = vld [vmem:[%s2] sm:$0xff]
  %v30 = vld [vmem:[%s2 + $0x8] sm:$0xff]
  %v31 = vld [vmem:[%s2 + $0x10] sm:$0xff]
  %v32 = vld [vmem:[%s2 + $0x18] sm:$0xff]
  %v33 = vld [vmem:[%s3] sm:$0xff]
  %v34 = vld [vmem:[%s3 + $0x8] sm:$0xff]
  %v35 = vld [vmem:[%s3 + $0x10] sm:$0xff]
  %v36 = vld [vmem:[%s3 + $0x18] sm:$0xff]
  %v37 = vld [vmem:[%s0] sm:$0xff]
  %v38 = vld [vmem:[%s0 + $0x8] sm:$0xff]
  %v39 = vld [vmem:[%s0 + $0x10] sm:$0xff]
  %v40 = vld [vmem:[%s0 + $0x18] sm:$0xff]
  %v41 = vrot.slane %v37, 7
  %v42 = vrot.slane %v38, 7
  %v43 = vrot.slane %v39, 7
  %v44 = vrot.slane %v40, 7
  %v45 = vlaneseq
  %v46 = vshrl.u32 %v45, 7
  %vm47 = vcmp.lt.s32.totalorder %v46, 1
  %v48 = vsel %vm47, %v43, %v44
  %v49 = vsel %vm47, %v42, %v43
  %v50 = vsel %vm47, %v41, %v42
  %v51 = vsel %vm47, %v44, %v41
  %53 = vset.pattern.permute.xlu0 0
  %54 = vperm.xlu0 %53, %v29
  %v55 = vpop.permute.xlu0 %54
  %58 = vset.pattern.permute.xlu0 0
  %59 = vperm.xlu0 %58, %v30
  %v60 = vpop.permute.xlu0 %59
  %63 = vset.pattern.permute.xlu0 0
  %64 = vperm.xlu0 %63, %v31
  %v65 = vpop.permute.xlu0 %64
  %68 = vset.pattern.permute.xlu0 0
  %69 = vperm.xlu0 %68, %v32
  %v70 = vpop.permute.xlu0 %69
  %v72 = vmul.f32 %v51, %v55
  %v73 = vmul.f32 %v50, %v60
  %v74 = vmul.f32 %v49, %v65
  %v75 = vmul.f32 %v48, %v70
  %v76 = vrot.slane %v37, 1
  %v77 = vrot.slane %v38, 1
  %v78 = vrot.slane %v39, 1
  %v79 = vrot.slane %v40, 1
  %vm80 = vcmp.lt.s32.totalorder %v46, 7
  %v81 = vsel %vm80, %v78, %v79
  %v82 = vsel %vm80, %v77, %v78
  %v83 = vsel %vm80, %v76, %v77
  %v84 = vsel %vm80, %v79, %v76
  %86 = vset.pattern.permute.xlu0 0
  %87 = vperm.xlu0 %86, %v33
  %v88 = vpop.permute.xlu0 %87
  %91 = vset.pattern.permute.xlu0 0
  %92 = vperm.xlu0 %91, %v34
  %v93 = vpop.permute.xlu0 %92
  %96 = vset.pattern.permute.xlu0 0
  %97 = vperm.xlu0 %96, %v35
  %v98 = vpop.permute.xlu0 %97
  %101 = vset.pattern.permute.xlu0 0
  %102 = vperm.xlu0 %101, %v36
  %v103 = vpop.permute.xlu0 %102
  %v105 = vmul.f32 %v83, %v88
  %v106 = vmul.f32 %v82, %v93
  %v107 = vmul.f32 %v81, %v98
  %v108 = vmul.f32 %v84, %v103
  %v109 = vld [vmem:[%s1] sm:$0xff]
  %v110 = vld [vmem:[%s1 + $0x8] sm:$0xff]
  %v111 = vld [vmem:[%s1 + $0x10] sm:$0xff]
  %v112 = vld [vmem:[%s1 + $0x18] sm:$0xff]
  %v113 = vld [vmem:[%s1 + $0x20] sm:$0xff]
  %v114 = vld [vmem:[%s1 + $0x28] sm:$0xff]
  %v115 = vld [vmem:[%s1 + $0x30] sm:$0xff]
  %v116 = vld [vmem:[%s1 + $0x38] sm:$0xff]
  %v117 = vld [vmem:[%s1 + $0x40] sm:$0xff]
  %v118 = vld [vmem:[%s1 + $0x48] sm:$0xff]
  %v119 = vld [vmem:[%s1 + $0x50] sm:$0xff]
  %v120 = vld [vmem:[%s1 + $0x58] sm:$0xff]
  %v121 = vld [vmem:[%s1 + $0x60] sm:$0xff]
  %v122 = vld [vmem:[%s1 + $0x68] sm:$0xff]
  %v123 = vld [vmem:[%s1 + $0x70] sm:$0xff]
  %v124 = vld [vmem:[%s1 + $0x78] sm:$0xff]
  %v125 = vld [vmem:[%s1 + $0x80] sm:$0xff]
  %v126 = vld [vmem:[%s1 + $0x88] sm:$0xff]
  %v127 = vld [vmem:[%s1 + $0x90] sm:$0xff]
  %v128 = vld [vmem:[%s1 + $0x98] sm:$0xff]
  %v129 = vld [vmem:[%s1 + $0xa0] sm:$0xff]
  %v130 = vld [vmem:[%s1 + $0xa8] sm:$0xff]
  %v131 = vld [vmem:[%s1 + $0xb0] sm:$0xff]
  %v132 = vld [vmem:[%s1 + $0xb8] sm:$0xff]
  %v133 = vld [vmem:[%s1 + $0xc0] sm:$0xff]
  %v134 = vld [vmem:[%s1 + $0xc8] sm:$0xff]
  %v135 = vld [vmem:[%s1 + $0xd0] sm:$0xff]
  %v136 = vld [vmem:[%s1 + $0xd8] sm:$0xff]
  %v137 = vld [vmem:[%s1 + $0xe0] sm:$0xff]
  %v138 = vld [vmem:[%s1 + $0xe8] sm:$0xff]
  %v139 = vld [vmem:[%s1 + $0xf0] sm:$0xff]
  %v140 = vld [vmem:[%s1 + $0xf8] sm:$0xff]
  %v141 = vld [vmem:[%s1 + $0x100] sm:$0xff]
  %v142 = vld [vmem:[%s1 + $0x108] sm:$0xff]
  %v143 = vld [vmem:[%s1 + $0x110] sm:$0xff]
  %v144 = vld [vmem:[%s1 + $0x118] sm:$0xff]
  %v145 = vld [vmem:[%s1 + $0x120] sm:$0xff]
  %v146 = vld [vmem:[%s1 + $0x128] sm:$0xff]
  %v147 = vld [vmem:[%s1 + $0x130] sm:$0xff]
  %v148 = vld [vmem:[%s1 + $0x138] sm:$0xff]
  %v149 = vld [vmem:[%s1 + $0x140] sm:$0xff]
  %v150 = vld [vmem:[%s1 + $0x148] sm:$0xff]
  %v151 = vld [vmem:[%s1 + $0x150] sm:$0xff]
  %v152 = vld [vmem:[%s1 + $0x158] sm:$0xff]
  %v153 = vld [vmem:[%s1 + $0x160] sm:$0xff]
  %v154 = vld [vmem:[%s1 + $0x168] sm:$0xff]
  %v155 = vld [vmem:[%s1 + $0x170] sm:$0xff]
  %v156 = vld [vmem:[%s1 + $0x178] sm:$0xff]
  %157 = vmatprep.subr.mxu0 0.0
  %158 = vmatpush1.msra.mxu0 %v124
  %159 = vmatprep.subr.mxu0 0.0
  %160 = vmatpush1.msra.mxu0 %v123
  %161 = vmatprep.subr.mxu0 0.0
  %162 = vmatpush1.msra.mxu0 %v122
  %163 = vmatprep.subr.mxu0 0.0
  %164 = vmatpush1.msra.mxu0 %v121
  %165 = vmatprep.subr.mxu0 0.0
  %166 = vmatpush1.msra.mxu0 %v120
  %167 = vmatprep.subr.mxu0 0.0
  %168 = vmatpush1.msra.mxu0 %v119
  %169 = vmatprep.subr.mxu0 0.0
  %170 = vmatpush1.msra.mxu0 %v118
  %171 = vmatprep.subr.mxu0 0.0
  %172 = vmatpush1.msra.mxu0 %v117
  %173 = vmatprep.subr.mxu0 0.0
  %174 = vmatpush1.msra.mxu0 %v116
  %175 = vmatprep.subr.mxu0 0.0
  %176 = vmatpush1.msra.mxu0 %v115
  %177 = vmatprep.subr.mxu0 0.0
  %178 = vmatpush1.msra.mxu0 %v114
  %179 = vmatprep.subr.mxu0 0.0
  %180 = vmatpush1.msra.mxu0 %v113
  %181 = vmatprep.subr.mxu0 0.0
  %182 = vmatpush1.msra.mxu0 %v112
  %183 = vmatprep.subr.mxu0 0.0
  %184 = vmatpush1.msra.mxu0 %v111
  %185 = vmatprep.subr.mxu0 0.0
  %186 = vmatpush1.msra.mxu0 %v110
  %187 = vmatprep.subr.mxu0 0.0
  %188 = vmatpush1.msra.mxu0 %v109
  %189 = vmatprep.subr.mxu0 0.0
  %190 = vmatpush2.msra.mxu0 %v140
  %191 = vmatprep.subr.mxu0 0.0
  %192 = vmatpush2.msra.mxu0 %v139
  %193 = vmatprep.subr.mxu0 0.0
  %194 = vmatpush2.msra.mxu0 %v138
  %195 = vmatprep.subr.mxu0 0.0
  %196 = vmatpush2.msra.mxu0 %v137
  %197 = vmatprep.subr.mxu0 0.0
  %198 = vmatpush2.msra.mxu0 %v136
  %199 = vmatprep.subr.mxu0 0.0
  %200 = vmatpush2.msra.mxu0 %v135
  %201 = vmatprep.subr.mxu0 0.0
  %202 = vmatpush2.msra.mxu0 %v134
  %203 = vmatprep.subr.mxu0 0.0
  %204 = vmatpush2.msra.mxu0 %v133
  %205 = vmatprep.subr.mxu0 0.0
  %206 = vmatpush2.msra.mxu0 %v132
  %207 = vmatprep.subr.mxu0 0.0
  %208 = vmatpush2.msra.mxu0 %v131
  %209 = vmatprep.subr.mxu0 0.0
  %210 = vmatpush2.msra.mxu0 %v130
  %211 = vmatprep.subr.mxu0 0.0
  %212 = vmatpush2.msra.mxu0 %v129
  %213 = vmatprep.subr.mxu0 0.0
  %214 = vmatpush2.msra.mxu0 %v128
  %215 = vmatprep.subr.mxu0 0.0
  %216 = vmatpush2.msra.mxu0 %v127
  %217 = vmatprep.subr.mxu0 0.0
  %218 = vmatpush2.msra.mxu0 %v126
  %219 = vmatprep.subr.mxu0 0.0
  %220 = vmatpush2.msra.mxu0 %v125
  %221 = vmatprep.mubr.f32.mxu0 %v37
  %222 = vmatmul.mubr.f32.gmra.mxu0 %v72
  %v223 = vpop.f32.mrf.mxu0
  %v224 = vadd.f32 0.0, %v223
  %v225 = vpop.f32.mrf.mxu0
  %226 = vmatprep.mubr.f32.mxu0 %v38
  %227 = vmatmul.mubr.f32.gmra.mxu0 %v73
  %v228 = vpop.f32.mrf.mxu0
  %v229 = vadd.f32 0.0, %v228
  %v230 = vpop.f32.mrf.mxu0
  %231 = vmatprep.mubr.f32.mxu0 %v39
  %232 = vmatmul.mubr.f32.gmra.mxu0 %v74
  %v233 = vpop.f32.mrf.mxu0
  %v234 = vadd.f32 0.0, %v233
  %v235 = vpop.f32.mrf.mxu0
  %236 = vmatprep.mubr.f32.mxu0 %v40
  %237 = vmatmul.mubr.f32.gmra.mxu0 %v75
  %v238 = vpop.f32.mrf.mxu0
  %v239 = vadd.f32 0.0, %v238
  %v240 = vpop.f32.mrf.mxu0
  %241 = vdwg.mxu0
  %242 = vmatprep.subr.mxu0 0.0
  %243 = vmatpush1.msra.mxu0 %v156
  %244 = vmatprep.subr.mxu0 0.0
  %245 = vmatpush1.msra.mxu0 %v155
  %246 = vmatprep.subr.mxu0 0.0
  %247 = vmatpush1.msra.mxu0 %v154
  %248 = vmatprep.subr.mxu0 0.0
  %249 = vmatpush1.msra.mxu0 %v153
  %250 = vmatprep.subr.mxu0 0.0
  %251 = vmatpush1.msra.mxu0 %v152
  %252 = vmatprep.subr.mxu0 0.0
  %253 = vmatpush1.msra.mxu0 %v151
  %254 = vmatprep.subr.mxu0 0.0
  %255 = vmatpush1.msra.mxu0 %v150
  %256 = vmatprep.subr.mxu0 0.0
  %257 = vmatpush1.msra.mxu0 %v149
  %258 = vmatprep.subr.mxu0 0.0
  %259 = vmatpush1.msra.mxu0 %v148
  %260 = vmatprep.subr.mxu0 0.0
  %261 = vmatpush1.msra.mxu0 %v147
  %262 = vmatprep.subr.mxu0 0.0
  %263 = vmatpush1.msra.mxu0 %v146
  %264 = vmatprep.subr.mxu0 0.0
  %265 = vmatpush1.msra.mxu0 %v145
  %266 = vmatprep.subr.mxu0 0.0
  %267 = vmatpush1.msra.mxu0 %v144
  %268 = vmatprep.subr.mxu0 0.0
  %269 = vmatpush1.msra.mxu0 %v143
  %270 = vmatprep.subr.mxu0 0.0
  %271 = vmatpush1.msra.mxu0 %v142
  %272 = vmatprep.subr.mxu0 0.0
  %273 = vmatpush1.msra.mxu0 %v141
  %274 = vmatprep.subr.mxu0 0.0
  %275 = vmatpush2.msra.mxu0 0.0
  %276 = vmatprep.subr.mxu0 0.0
  %277 = vmatpush2.msra.mxu0 0.0
  %278 = vmatprep.subr.mxu0 0.0
  %279 = vmatpush2.msra.mxu0 0.0
  %280 = vmatprep.subr.mxu0 0.0
  %281 = vmatpush2.msra.mxu0 0.0
  %282 = vmatprep.subr.mxu0 0.0
  %283 = vmatpush2.msra.mxu0 0.0
  %284 = vmatprep.subr.mxu0 0.0
  %285 = vmatpush2.msra.mxu0 0.0
  %286 = vmatprep.subr.mxu0 0.0
  %287 = vmatpush2.msra.mxu0 0.0
  %288 = vmatprep.subr.mxu0 0.0
  %289 = vmatpush2.msra.mxu0 0.0
  %290 = vmatprep.subr.mxu0 0.0
  %291 = vmatpush2.msra.mxu0 0.0
  %292 = vmatprep.subr.mxu0 0.0
  %293 = vmatpush2.msra.mxu0 0.0
  %294 = vmatprep.subr.mxu0 0.0
  %295 = vmatpush2.msra.mxu0 0.0
  %296 = vmatprep.subr.mxu0 0.0
  %297 = vmatpush2.msra.mxu0 0.0
  %298 = vmatprep.subr.mxu0 0.0
  %299 = vmatpush2.msra.mxu0 0.0
  %300 = vmatprep.subr.mxu0 0.0
  %301 = vmatpush2.msra.mxu0 0.0
  %302 = vmatprep.subr.mxu0 0.0
  %303 = vmatpush2.msra.mxu0 0.0
  %304 = vmatprep.subr.mxu0 0.0
  %305 = vmatpush2.msra.mxu0 0.0
  %306 = vmatprep.mubr.f32.mxu0 0.0
  %307 = vmatmul.mubr.f32.gmra.mxu0 %v105
  %v308 = vpop.f32.mrf.mxu0
  %v309 = vadd.f32 %v224, %v308
  %v310 = vpop.f32.mrf.mxu0
  %311 = vmatprep.mubr.f32.mxu0 0.0
  %312 = vmatmul.mubr.f32.gmra.mxu0 %v106
  %v313 = vpop.f32.mrf.mxu0
  %v314 = vadd.f32 %v229, %v313
  %v315 = vpop.f32.mrf.mxu0
  %316 = vmatprep.mubr.f32.mxu0 0.0
  %317 = vmatmul.mubr.f32.gmra.mxu0 %v107
  %v318 = vpop.f32.mrf.mxu0
  %v319 = vadd.f32 %v234, %v318
  %v320 = vpop.f32.mrf.mxu0
  %321 = vmatprep.mubr.f32.mxu0 0.0
  %322 = vmatmul.mubr.f32.gmra.mxu0 %v108
  %v323 = vpop.f32.mrf.mxu0
  %v324 = vadd.f32 %v239, %v323
  %v325 = vpop.f32.mrf.mxu0
  %326 = vdwg.mxu0
  %v327 = vld [vmem:[%s4] sm:$0x1]
  %v328 = vld [vmem:[%s5] sm:$0x1]
  %v329 = vadd.f32 %v309, %v314
  %v330 = vadd.f32 %v329, %v319
  %v331 = vadd.f32 %v330, %v324
  %v332 = vrot.slane %v331, 4
  %v333 = vadd.f32 %v331, %v332
  %v334 = vrot.slane %v333, 2
  %v335 = vadd.f32 %v333, %v334
  %v336 = vrot.slane %v335, 1
  %v337 = vadd.f32 %v335, %v336
  %338 = vrot.lane.b32.xlu0 %v337, 64
  %v339 = vpop.permute.xlu0 %338
  %v340 = vadd.f32 %v337, %v339
  %341 = vrot.lane.b32.xlu0 %v340, 32
  %v342 = vpop.permute.xlu0 %341
  %v343 = vadd.f32 %v340, %v342
  %344 = vrot.lane.b32.xlu0 %v343, 16
  %v345 = vpop.permute.xlu0 %344
  %v346 = vadd.f32 %v343, %v345
  %347 = vrot.lane.b32.xlu0 %v346, 8
  %v348 = vpop.permute.xlu0 %347
  %v349 = vadd.f32 %v346, %v348
  %v350 = vmul.f32 %v309, %v309
  %v351 = vmul.f32 %v314, %v314
  %v352 = vmul.f32 %v319, %v319
  %v353 = vmul.f32 %v324, %v324
  %v354 = vadd.f32 %v350, %v351
  %v355 = vadd.f32 %v354, %v352
  %v356 = vadd.f32 %v355, %v353
  %v357 = vrot.slane %v356, 4
  %v358 = vadd.f32 %v356, %v357
  %v359 = vrot.slane %v358, 2
  %v360 = vadd.f32 %v358, %v359
  %v361 = vrot.slane %v360, 1
  %v362 = vadd.f32 %v360, %v361
  %363 = vrot.lane.b32.xlu0 %v362, 64
  %v364 = vpop.permute.xlu0 %363
  %v365 = vadd.f32 %v362, %v364
  %366 = vrot.lane.b32.xlu0 %v365, 32
  %v367 = vpop.permute.xlu0 %366
  %v368 = vadd.f32 %v365, %v367
  %369 = vrot.lane.b32.xlu0 %v368, 16
  %v370 = vpop.permute.xlu0 %369
  %v371 = vadd.f32 %v368, %v370
  %372 = vrot.lane.b32.xlu0 %v371, 8
  %v373 = vpop.permute.xlu0 %372
  %v374 = vadd.f32 %v371, %v373
  %v375 = vmul.f32 %v349, 0.001953125
  %v376 = vmul.f32 %v374, 0.001953125
  %v377 = vmul.f32 %v375, %v375
  %v378 = vsub.f32 %v376, %v377
  %v379 = vadd.f32 %v378, 1e-05
  %v380 = vrsqrt.pop %v379
  %v381 = vmul.f32 %v380, %v327
  %v382 = vmul.f32 %v375, %v381
  %v383 = vsub.f32 %v328, %v382
  %v384 = vlaneseq
  %v385 = vshrl.u32 %v384, 7
  %v386 = vsub.s32 0, %v385
  %v387 = vrot.slane %v381, %v386
  %v388 = vmul.f32 %v309, %v387
  %v389 = vmul.f32 %v314, %v387
  %v390 = vmul.f32 %v319, %v387
  %v391 = vmul.f32 %v324, %v387
  %v393 = vlaneseq
  %v394 = vshrl.u32 %v393, 7
  %v395 = vsub.s32 0, %v394
  %v396 = vrot.slane %v383, %v395
  %v398 = vadd.f32 %v388, %v396
  %v399 = vadd.f32 %v389, %v396
  %v400 = vadd.f32 %v390, %v396
  %v401 = vadd.f32 %v391, %v396
  %v402 = vmax.f32 %v398, 0.0
  %v403 = vmax.f32 %v399, 0.0
  %v404 = vmax.f32 %v400, 0.0
  %v405 = vmax.f32 %v401, 0.0
  %v406 = vrot.slane %v402, 7
  %v407 = vrot.slane %v403, 7
  %v408 = vrot.slane %v404, 7
  %v409 = vrot.slane %v405, 7
  %v410 = vsel %vm47, %v408, %v409
  %v411 = vsel %vm47, %v407, %v408
  %v412 = vsel %vm47, %v406, %v407
  %v413 = vsel %vm47, %v409, %v406
  %v414 = vmul.f32 %v413, %v55
  %v415 = vmul.f32 %v412, %v60
  %v416 = vmul.f32 %v411, %v65
  %v417 = vmul.f32 %v410, %v70
  %v418 = vrot.slane %v402, 1
  %v419 = vrot.slane %v403, 1
  %v420 = vrot.slane %v404, 1
  %v421 = vrot.slane %v405, 1
  %v422 = vsel %vm80, %v420, %v421
  %v423 = vsel %vm80, %v419, %v420
  %v424 = vsel %vm80, %v418, %v419
  %v425 = vsel %vm80, %v421, %v418
  %v426 = vmul.f32 %v424, %v88
  %v427 = vmul.f32 %v423, %v93
  %v428 = vmul.f32 %v422, %v98
  %v429 = vmul.f32 %v425, %v103
  %430 = vmatprep.subr.mxu0 0.0
  %431 = vmatpush1.msra.mxu0 %v124
  %432 = vmatprep.subr.mxu0 0.0
  %433 = vmatpush1.msra.mxu0 %v123
  %434 = vmatprep.subr.mxu0 0.0
  %435 = vmatpush1.msra.mxu0 %v122
  %436 = vmatprep.subr.mxu0 0.0
  %437 = vmatpush1.msra.mxu0 %v121
  %438 = vmatprep.subr.mxu0 0.0
  %439 = vmatpush1.msra.mxu0 %v120
  %440 = vmatprep.subr.mxu0 0.0
  %441 = vmatpush1.msra.mxu0 %v119
  %442 = vmatprep.subr.mxu0 0.0
  %443 = vmatpush1.msra.mxu0 %v118
  %444 = vmatprep.subr.mxu0 0.0
  %445 = vmatpush1.msra.mxu0 %v117
  %446 = vmatprep.subr.mxu0 0.0
  %447 = vmatpush1.msra.mxu0 %v116
  %448 = vmatprep.subr.mxu0 0.0
  %449 = vmatpush1.msra.mxu0 %v115
  %450 = vmatprep.subr.mxu0 0.0
  %451 = vmatpush1.msra.mxu0 %v114
  %452 = vmatprep.subr.mxu0 0.0
  %453 = vmatpush1.msra.mxu0 %v113
  %454 = vmatprep.subr.mxu0 0.0
  %455 = vmatpush1.msra.mxu0 %v112
  %456 = vmatprep.subr.mxu0 0.0
  %457 = vmatpush1.msra.mxu0 %v111
  %458 = vmatprep.subr.mxu0 0.0
  %459 = vmatpush1.msra.mxu0 %v110
  %460 = vmatprep.subr.mxu0 0.0
  %461 = vmatpush1.msra.mxu0 %v109
  %462 = vmatprep.subr.mxu0 0.0
  %463 = vmatpush2.msra.mxu0 %v140
  %464 = vmatprep.subr.mxu0 0.0
  %465 = vmatpush2.msra.mxu0 %v139
  %466 = vmatprep.subr.mxu0 0.0
  %467 = vmatpush2.msra.mxu0 %v138
  %468 = vmatprep.subr.mxu0 0.0
  %469 = vmatpush2.msra.mxu0 %v137
  %470 = vmatprep.subr.mxu0 0.0
  %471 = vmatpush2.msra.mxu0 %v136
  %472 = vmatprep.subr.mxu0 0.0
  %473 = vmatpush2.msra.mxu0 %v135
  %474 = vmatprep.subr.mxu0 0.0
  %475 = vmatpush2.msra.mxu0 %v134
  %476 = vmatprep.subr.mxu0 0.0
  %477 = vmatpush2.msra.mxu0 %v133
  %478 = vmatprep.subr.mxu0 0.0
  %479 = vmatpush2.msra.mxu0 %v132
  %480 = vmatprep.subr.mxu0 0.0
  %481 = vmatpush2.msra.mxu0 %v131
  %482 = vmatprep.subr.mxu0 0.0
  %483 = vmatpush2.msra.mxu0 %v130
  %484 = vmatprep.subr.mxu0 0.0
  %485 = vmatpush2.msra.mxu0 %v129
  %486 = vmatprep.subr.mxu0 0.0
  %487 = vmatpush2.msra.mxu0 %v128
  %488 = vmatprep.subr.mxu0 0.0
  %489 = vmatpush2.msra.mxu0 %v127
  %490 = vmatprep.subr.mxu0 0.0
  %491 = vmatpush2.msra.mxu0 %v126
  %492 = vmatprep.subr.mxu0 0.0
  %493 = vmatpush2.msra.mxu0 %v125
  %494 = vmatprep.mubr.f32.mxu0 %v402
  %495 = vmatmul.mubr.f32.gmra.mxu0 %v414
  %v496 = vpop.f32.mrf.mxu0
  %v497 = vadd.f32 0.0, %v496
  %v498 = vpop.f32.mrf.mxu0
  %499 = vmatprep.mubr.f32.mxu0 %v403
  %500 = vmatmul.mubr.f32.gmra.mxu0 %v415
  %v501 = vpop.f32.mrf.mxu0
  %v502 = vadd.f32 0.0, %v501
  %v503 = vpop.f32.mrf.mxu0
  %504 = vmatprep.mubr.f32.mxu0 %v404
  %505 = vmatmul.mubr.f32.gmra.mxu0 %v416
  %v506 = vpop.f32.mrf.mxu0
  %v507 = vadd.f32 0.0, %v506
  %v508 = vpop.f32.mrf.mxu0
  %509 = vmatprep.mubr.f32.mxu0 %v405
  %510 = vmatmul.mubr.f32.gmra.mxu0 %v417
  %v511 = vpop.f32.mrf.mxu0
  %v512 = vadd.f32 0.0, %v511
  %v513 = vpop.f32.mrf.mxu0
  %514 = vdwg.mxu0
  %515 = vmatprep.subr.mxu0 0.0
  %516 = vmatpush1.msra.mxu0 %v156
  %517 = vmatprep.subr.mxu0 0.0
  %518 = vmatpush1.msra.mxu0 %v155
  %519 = vmatprep.subr.mxu0 0.0
  %520 = vmatpush1.msra.mxu0 %v154
  %521 = vmatprep.subr.mxu0 0.0
  %522 = vmatpush1.msra.mxu0 %v153
  %523 = vmatprep.subr.mxu0 0.0
  %524 = vmatpush1.msra.mxu0 %v152
  %525 = vmatprep.subr.mxu0 0.0
  %526 = vmatpush1.msra.mxu0 %v151
  %527 = vmatprep.subr.mxu0 0.0
  %528 = vmatpush1.msra.mxu0 %v150
  %529 = vmatprep.subr.mxu0 0.0
  %530 = vmatpush1.msra.mxu0 %v149
  %531 = vmatprep.subr.mxu0 0.0
  %532 = vmatpush1.msra.mxu0 %v148
  %533 = vmatprep.subr.mxu0 0.0
  %534 = vmatpush1.msra.mxu0 %v147
  %535 = vmatprep.subr.mxu0 0.0
  %536 = vmatpush1.msra.mxu0 %v146
  %537 = vmatprep.subr.mxu0 0.0
  %538 = vmatpush1.msra.mxu0 %v145
  %539 = vmatprep.subr.mxu0 0.0
  %540 = vmatpush1.msra.mxu0 %v144
  %541 = vmatprep.subr.mxu0 0.0
  %542 = vmatpush1.msra.mxu0 %v143
  %543 = vmatprep.subr.mxu0 0.0
  %544 = vmatpush1.msra.mxu0 %v142
  %545 = vmatprep.subr.mxu0 0.0
  %546 = vmatpush1.msra.mxu0 %v141
  %547 = vmatprep.subr.mxu0 0.0
  %548 = vmatpush2.msra.mxu0 0.0
  %549 = vmatprep.subr.mxu0 0.0
  %550 = vmatpush2.msra.mxu0 0.0
  %551 = vmatprep.subr.mxu0 0.0
  %552 = vmatpush2.msra.mxu0 0.0
  %553 = vmatprep.subr.mxu0 0.0
  %554 = vmatpush2.msra.mxu0 0.0
  %555 = vmatprep.subr.mxu0 0.0
  %556 = vmatpush2.msra.mxu0 0.0
  %557 = vmatprep.subr.mxu0 0.0
  %558 = vmatpush2.msra.mxu0 0.0
  %559 = vmatprep.subr.mxu0 0.0
  %560 = vmatpush2.msra.mxu0 0.0
  %561 = vmatprep.subr.mxu0 0.0
  %562 = vmatpush2.msra.mxu0 0.0
  %563 = vmatprep.subr.mxu0 0.0
  %564 = vmatpush2.msra.mxu0 0.0
  %565 = vmatprep.subr.mxu0 0.0
  %566 = vmatpush2.msra.mxu0 0.0
  %567 = vmatprep.subr.mxu0 0.0
  %568 = vmatpush2.msra.mxu0 0.0
  %569 = vmatprep.subr.mxu0 0.0
  %570 = vmatpush2.msra.mxu0 0.0
  %571 = vmatprep.subr.mxu0 0.0
  %572 = vmatpush2.msra.mxu0 0.0
  %573 = vmatprep.subr.mxu0 0.0
  %574 = vmatpush2.msra.mxu0 0.0
  %575 = vmatprep.subr.mxu0 0.0
  %576 = vmatpush2.msra.mxu0 0.0
  %577 = vmatprep.subr.mxu0 0.0
  %578 = vmatpush2.msra.mxu0 0.0
  %579 = vmatprep.mubr.f32.mxu0 0.0
  %580 = vmatmul.mubr.f32.gmra.mxu0 %v426
  %v581 = vpop.f32.mrf.mxu0
  %v582 = vadd.f32 %v497, %v581
  %v583 = vpop.f32.mrf.mxu0
  %584 = vmatprep.mubr.f32.mxu0 0.0
  %585 = vmatmul.mubr.f32.gmra.mxu0 %v427
  %v586 = vpop.f32.mrf.mxu0
  %v587 = vadd.f32 %v502, %v586
  %v588 = vpop.f32.mrf.mxu0
  %589 = vmatprep.mubr.f32.mxu0 0.0
  %590 = vmatmul.mubr.f32.gmra.mxu0 %v428
  %v591 = vpop.f32.mrf.mxu0
  %v592 = vadd.f32 %v507, %v591
  %v593 = vpop.f32.mrf.mxu0
  %594 = vmatprep.mubr.f32.mxu0 0.0
  %595 = vmatmul.mubr.f32.gmra.mxu0 %v429
  %v596 = vpop.f32.mrf.mxu0
  %v597 = vadd.f32 %v512, %v596
  %v598 = vpop.f32.mrf.mxu0
  %599 = vdwg.mxu0
  %v600 = vld [vmem:[%s6] sm:$0x1]
  %v601 = vld [vmem:[%s7] sm:$0x1]
  %v602 = vadd.f32 %v582, %v587
  %v603 = vadd.f32 %v602, %v592
  %v604 = vadd.f32 %v603, %v597
  %v605 = vrot.slane %v604, 4
  %v606 = vadd.f32 %v604, %v605
  %v607 = vrot.slane %v606, 2
  %v608 = vadd.f32 %v606, %v607
  %v609 = vrot.slane %v608, 1
  %v610 = vadd.f32 %v608, %v609
  %611 = vrot.lane.b32.xlu0 %v610, 64
  %v612 = vpop.permute.xlu0 %611
  %v613 = vadd.f32 %v610, %v612
  %614 = vrot.lane.b32.xlu0 %v613, 32
  %v615 = vpop.permute.xlu0 %614
  %v616 = vadd.f32 %v613, %v615
  %617 = vrot.lane.b32.xlu0 %v616, 16
  %v618 = vpop.permute.xlu0 %617
  %v619 = vadd.f32 %v616, %v618
  %620 = vrot.lane.b32.xlu0 %v619, 8
  %v621 = vpop.permute.xlu0 %620
  %v622 = vadd.f32 %v619, %v621
  %v623 = vmul.f32 %v582, %v582
  %v624 = vmul.f32 %v587, %v587
  %v625 = vmul.f32 %v592, %v592
  %v626 = vmul.f32 %v597, %v597
  %v627 = vadd.f32 %v623, %v624
  %v628 = vadd.f32 %v627, %v625
  %v629 = vadd.f32 %v628, %v626
  %v630 = vrot.slane %v629, 4
  %v631 = vadd.f32 %v629, %v630
  %v632 = vrot.slane %v631, 2
  %v633 = vadd.f32 %v631, %v632
  %v634 = vrot.slane %v633, 1
  %v635 = vadd.f32 %v633, %v634
  %636 = vrot.lane.b32.xlu0 %v635, 64
  %v637 = vpop.permute.xlu0 %636
  %v638 = vadd.f32 %v635, %v637
  %639 = vrot.lane.b32.xlu0 %v638, 32
  %v640 = vpop.permute.xlu0 %639
  %v641 = vadd.f32 %v638, %v640
  %642 = vrot.lane.b32.xlu0 %v641, 16
  %v643 = vpop.permute.xlu0 %642
  %v644 = vadd.f32 %v641, %v643
  %645 = vrot.lane.b32.xlu0 %v644, 8
  %v646 = vpop.permute.xlu0 %645
  %v647 = vadd.f32 %v644, %v646
  %v648 = vmul.f32 %v622, 0.001953125
  %v649 = vmul.f32 %v647, 0.001953125
  %v650 = vmul.f32 %v648, %v648
  %v651 = vsub.f32 %v649, %v650
  %v652 = vadd.f32 %v651, 1e-05
  %v653 = vrsqrt.pop %v652
  %v654 = vmul.f32 %v653, %v600
  %v655 = vmul.f32 %v648, %v654
  %v656 = vsub.f32 %v601, %v655
  %v657 = vlaneseq
  %v658 = vshrl.u32 %v657, 7
  %v659 = vsub.s32 0, %v658
  %v660 = vrot.slane %v654, %v659
  %v661 = vmul.f32 %v582, %v660
  %v662 = vmul.f32 %v587, %v660
  %v663 = vmul.f32 %v592, %v660
  %v664 = vmul.f32 %v597, %v660
  %v666 = vlaneseq
  %v667 = vshrl.u32 %v666, 7
  %v668 = vsub.s32 0, %v667
  %v669 = vrot.slane %v656, %v668
  %v671 = vadd.f32 %v661, %v669
  %v672 = vadd.f32 %v662, %v669
  %v673 = vadd.f32 %v663, %v669
  %v674 = vadd.f32 %v664, %v669
  %v675 = vadd.f32 %v671, %v37
  %v676 = vadd.f32 %v672, %v38
  %v677 = vadd.f32 %v673, %v39
  %v678 = vadd.f32 %v674, %v40
  %v679 = vmax.f32 %v675, 0.0
  %v680 = vmax.f32 %v676, 0.0
  %v681 = vmax.f32 %v677, 0.0
  %v682 = vmax.f32 %v678, 0.0
  %683 = vst [vmem:[%s8] sm:$0xff] %v679
  %684 = vst [vmem:[%s8 + $0x8] sm:$0xff] %v680
  %685 = vst [vmem:[%s8 + $0x10] sm:$0xff] %v681
  %686 = vst [vmem:[%s8 + $0x18] sm:$0xff] %v682
  // Predicated region
  $region34: #{basic_block_forward.1} parent=0 // pred_check
    _
  $region35: #{basic_block_forward.1} parent=0 // pred_check_branch
    %688 = sbr.rel (0) target = $region37
  $region36: #{basic_block_forward.1} parent=0 // pred_region
    _
  $region37: #{basic_block_forward.1} parent=0 // pred_fallthru
    _
  // Predicated region
  $region38: #{basic_block_forward.1} parent=0 // pred_check
    _
  $region39: #{basic_block_forward.1} parent=0 // pred_check_branch
    %690 = sbr.rel (0) target = $region41
  $region40: #{basic_block_forward.1} parent=0 // pred_region
    _
  $region41: #{basic_block_forward.1} parent=0 // pred_fallthru
    _

</llo_original>
